<compile_context>
chip_gen: v7x
topology: tpu7x:2x2x1
jax: 0.10.0
libtpu: 0.0.40
codegen_flags: <defaults>
</compile_context>

<pallas_src>
import functools

import jax
import jax.numpy as jnp
from jax.experimental import pallas as pl
from jax.experimental.pallas import tpu as pltpu

LANE = 128       # hidden dim is padded to this so intermediates are lane-dense
ALIGN = 16       # batch-tile granularity (bf16 sublane-pack friendly)
MAX_TILE_B = 1024


def _round_up(n, m):
    return ((n + m - 1) // m) * m


def _choose_tile_b(b_al):
    """Pick a batch tile: >=2 grid steps when possible (v7x megacore), <=~12.5% dead rows."""
    if b_al <= ALIGN:
        return b_al
    cap = min(MAX_TILE_B, _round_up(-(-b_al // 2), ALIGN))   # at most half the batch per tile
    t = cap
    while t > ALIGN:
        waste = _round_up(b_al, t) - b_al
        if waste * 8 <= b_al:                                  # dead-row padding <= 12.5%
            return t
        t -= ALIGN
    return ALIGN


def _qnet_kernel(x_ref, w1_ref, b1_ref, w2_ref, b2_ref, w3_ref, b3_ref, o_ref):
    # One batch tile per grid step. bf16 operands on the MXU, f32 accumulation,
    # bias add / ReLU in f32, re-cast to bf16 only to feed the next matmul.
    x = x_ref[...]                                                        # (TILE_B, 16) bf16
    h1 = jnp.dot(x, w1_ref[...], preferred_element_type=jnp.float32) + b1_ref[...]
    h1 = jnp.maximum(h1, 0.0).astype(jnp.bfloat16)                        # (TILE_B, 128)
    h2 = jnp.dot(h1, w2_ref[...], preferred_element_type=jnp.float32) + b2_ref[...]
    h2 = jnp.maximum(h2, 0.0).astype(jnp.bfloat16)                        # (TILE_B, 128)
    o_ref[...] = (jnp.dot(h2, w3_ref[...], preferred_element_type=jnp.float32)
                  + b3_ref[...]).astype(o_ref.dtype)                      # (TILE_B, 4) store


def pack_params(w1, b1, w2, b2, w3, b3):
    """Pad ONLY the hidden dims to 128 lanes; weights -> bf16, biases -> (1, n) f32.

    Input dim (16) and output dim (4) are left unpadded — those arrays stream per batch
    tile / per row, so padding them would inflate HBM traffic. Hidden padding is exact:
    padded hidden lanes stay 0 through ReLU(0)=0 and hit zero weight rows in the next layer.
    """
    in_size, hid = w1.shape
    out_size = w3.shape[1]
    hid_p = _round_up(hid, LANE)

    w1p = jnp.zeros((in_size, hid_p), jnp.float32).at[:, :hid].set(w1).astype(jnp.bfloat16)
    b1p = jnp.zeros((1, hid_p), jnp.float32).at[:, :hid].set(b1.reshape(1, hid))
    w2p = jnp.zeros((hid_p, hid_p), jnp.float32).at[:hid, :hid].set(w2).astype(jnp.bfloat16)
    b2p = jnp.zeros((1, hid_p), jnp.float32).at[:, :hid].set(b2.reshape(1, hid))
    w3p = jnp.zeros((hid_p, out_size), jnp.float32).at[:hid, :].set(w3).astype(jnp.bfloat16)
    b3p = b3.reshape(1, out_size).astype(jnp.float32)
    return w1p, b1p, w2p, b2p, w3p, b3p


@jax.jit
def qnetwork_forward(x, w1p, b1p, w2p, b2p, w3p, b3p):
    B, in_size = x.shape
    hid_p = w1p.shape[1]
    out_size = w3p.shape[1]

    # Batch padding/tiling (static at trace time).
    b_al = _round_up(B, ALIGN)
    tile_b = _choose_tile_b(b_al)
    b_pad = _round_up(b_al, tile_b)

    xb = x.astype(jnp.bfloat16)                       # unpadded 16-wide feature stream
    if b_pad != B:
        xb = jnp.pad(xb, ((0, b_pad - B), (0, 0)))

    # Advisory cost: this kernel is HBM-bandwidth dominated.
    flops = 2 * b_pad * (in_size * hid_p + hid_p * hid_p + hid_p * out_size)
    bytes_accessed = (
        b_pad * in_size * 2                                    # bf16 input stream
        + w1p.size * 2 + w2p.size * 2 + w3p.size * 2           # resident bf16 weights
        + b1p.size * 4 + b2p.size * 4 + b3p.size * 4           # resident f32 biases
        + b_pad * out_size * 4                                 # narrow f32 output stream
    )

    const2d = lambda shape: pl.BlockSpec(shape, lambda i: (0, 0))   # weights stay resident

    out = pl.pallas_call(
        _qnet_kernel,
        out_shape=jax.ShapeDtypeStruct((b_pad, out_size), jnp.float32),
        grid=(b_pad // tile_b,),
        in_specs=[
            pl.BlockSpec((tile_b, in_size), lambda i: (i, 0)),
            const2d(w1p.shape), const2d(b1p.shape),
            const2d(w2p.shape), const2d(b2p.shape),
            const2d(w3p.shape), const2d(b3p.shape),
        ],
        out_specs=pl.BlockSpec((tile_b, out_size), lambda i: (i, 0)),
        compiler_params=pltpu.CompilerParams(
            dimension_semantics=("parallel",),   # shards batch tiles across TCs on v7x
        ),
        cost_estimate=pl.CostEstimate(
            flops=flops, transcendentals=0, bytes_accessed=bytes_accessed),
    )(xb, w1p, b1p, w2p, b2p, w3p, b3p)

    return out if b_pad == B else out[:B]


def init_params(key, input_size, hidden, output_size):
    # Deterministic init mimicking PyTorch nn.Linear default: U(-1/sqrt(fan_in), 1/sqrt(fan_in)).
    # Weights stored (in_features, out_features), i.e. transposed vs. PyTorch, so y = x @ W + b.
    ks = jax.random.split(key, 6)

    def linear(kw, kb, fan_in, fan_out):
        bound = 1.0 / jnp.sqrt(jnp.float32(fan_in))
        w = jax.random.uniform(kw, (fan_in, fan_out), jnp.float32, -bound, bound)
        b = jax.random.uniform(kb, (1, fan_out), jnp.float32, -bound, bound)
        return w, b

    w1, b1 = linear(ks[0], ks[1], input_size, hidden)
    w2, b2 = linear(ks[2], ks[3], hidden, hidden)
    w3, b3 = linear(ks[4], ks[5], hidden, output_size)
    return w1, b1, w2, b2, w3, b3


def reference_forward(x, w1, b1, w2, b2, w3, b3):
    h1 = jnp.maximum(x @ w1 + b1, 0.0)
    h2 = jnp.maximum(h1 @ w2 + b2, 0.0)
    return h2 @ w3 + b3


if __name__ == "__main__":
    key = jax.random.PRNGKey(0)
    k_x, k_p = jax.random.split(key)

    batch = 8
    input_size = 16    # flattened maze-state features
    hidden = 64        # fixed by the module definition
    output_size = 4    # 4 maze actions

    x = jax.random.normal(k_x, (batch, input_size), jnp.float32)
    params_f32 = init_params(k_p, input_size, hidden, output_size)
    params_packed = pack_params(*params_f32)

    out = qnetwork_forward(x, *params_packed)
    out = jax.block_until_ready(out)

    ref = reference_forward(x, *params_f32)
    assert out.shape == (batch, output_size)
    # Tolerance accounts for bf16 weights/activations with f32 accumulation.
    assert jnp.allclose(out, ref, atol=2e-2, rtol=2e-2), "mismatch vs JAX f32 reference"

    print("KERNEL_OK")
</pallas_src>

<mosaic_0001>
module attributes {stable_mosaic.version = 11 : i64} {
  func.func @_qnet_kernel(%arg0: i32, %arg1: memref<16x16xbf16, #tpu.memory_space<vmem>>, %arg2: memref<16x128xbf16, #tpu.memory_space<vmem>>, %arg3: memref<1x128xf32, #tpu.memory_space<vmem>>, %arg4: memref<128x128xbf16, #tpu.memory_space<vmem>>, %arg5: memref<1x128xf32, #tpu.memory_space<vmem>>, %arg6: memref<128x4xbf16, #tpu.memory_space<vmem>>, %arg7: memref<1x4xf32, #tpu.memory_space<vmem>>, %arg8: memref<16x4xf32, #tpu.memory_space<vmem>>) attributes {dimension_semantics = [#tpu.dimension_semantics<parallel>], iteration_bounds = array<i64: 1>, scalar_prefetch = 0 : i64, scratch_operands = 0 : i64, tpu.core_type = #tpu.core_type<tc>, window_params = [{transform_indices = @transform_0, window_bounds = array<i64: 16, 16>}, {pipeline_mode = #tpu.pipeline_mode<synchronous>, transform_indices = @transform_1, window_bounds = array<i64: 16, 128>}, {pipeline_mode = #tpu.pipeline_mode<synchronous>, transform_indices = @transform_2, window_bounds = array<i64: 1, 128>}, {pipeline_mode = #tpu.pipeline_mode<synchronous>, transform_indices = @transform_3, window_bounds = array<i64: 128, 128>}, {pipeline_mode = #tpu.pipeline_mode<synchronous>, transform_indices = @transform_4, window_bounds = array<i64: 1, 128>}, {pipeline_mode = #tpu.pipeline_mode<synchronous>, transform_indices = @transform_5, window_bounds = array<i64: 128, 4>}, {pipeline_mode = #tpu.pipeline_mode<synchronous>, transform_indices = @transform_6, window_bounds = array<i64: 1, 4>}, {transform_indices = @transform_7, window_bounds = array<i64: 16, 4>}]} {
    %c0 = arith.constant 0 : index
    %c0_0 = arith.constant 0 : index
    %0 = vector.load %arg1[%c0, %c0_0] : memref<16x16xbf16, #tpu.memory_space<vmem>>, vector<16x16xbf16>
    %c0_1 = arith.constant 0 : index
    %c0_2 = arith.constant 0 : index
    %1 = vector.load %arg2[%c0_1, %c0_2] : memref<16x128xbf16, #tpu.memory_space<vmem>>, vector<16x128xbf16>
    %cst = arith.constant dense<0.000000e+00> : vector<16x128xf32>
    %2 = tpu.matmul %0, %1, %cst {dimension_numbers = #tpu.dot_dimension_numbers<[1], [0], [0], [1], [0, 0, 1, 1], [], []>} : vector<16x16xbf16>, vector<16x128xbf16>, vector<16x128xf32> -> vector<16x128xf32>
    %c0_3 = arith.constant 0 : index
    %c0_4 = arith.constant 0 : index
    %3 = vector.load %arg3[%c0_3, %c0_4] : memref<1x128xf32, #tpu.memory_space<vmem>>, vector<1x128xf32>
    %4 = vector.broadcast %3 : vector<1x128xf32> to vector<16x128xf32>
    %5 = arith.addf %2, %4 : vector<16x128xf32>
    %cst_5 = arith.constant 0.000000e+00 : f32
    %6 = vector.broadcast %cst_5 : f32 to vector<16x128xf32>
    %7 = arith.maximumf %5, %6 : vector<16x128xf32>
    %8 = arith.truncf %7 : vector<16x128xf32> to vector<16x128xbf16>
    %c0_6 = arith.constant 0 : index
    %c0_7 = arith.constant 0 : index
    %9 = vector.load %arg4[%c0_6, %c0_7] : memref<128x128xbf16, #tpu.memory_space<vmem>>, vector<128x128xbf16>
    %cst_8 = arith.constant dense<0.000000e+00> : vector<16x128xf32>
    %10 = tpu.matmul %8, %9, %cst_8 {dimension_numbers = #tpu.dot_dimension_numbers<[1], [0], [0], [1], [0, 0, 1, 1], [], []>} : vector<16x128xbf16>, vector<128x128xbf16>, vector<16x128xf32> -> vector<16x128xf32>
    %c0_9 = arith.constant 0 : index
    %c0_10 = arith.constant 0 : index
    %11 = vector.load %arg5[%c0_9, %c0_10] : memref<1x128xf32, #tpu.memory_space<vmem>>, vector<1x128xf32>
    %12 = vector.broadcast %11 : vector<1x128xf32> to vector<16x128xf32>
    %13 = arith.addf %10, %12 : vector<16x128xf32>
    %cst_11 = arith.constant 0.000000e+00 : f32
    %14 = vector.broadcast %cst_11 : f32 to vector<16x128xf32>
    %15 = arith.maximumf %13, %14 : vector<16x128xf32>
    %16 = arith.truncf %15 : vector<16x128xf32> to vector<16x128xbf16>
    %c0_12 = arith.constant 0 : index
    %c0_13 = arith.constant 0 : index
    %17 = vector.load %arg6[%c0_12, %c0_13] : memref<128x4xbf16, #tpu.memory_space<vmem>>, vector<128x4xbf16>
    %cst_14 = arith.constant dense<0.000000e+00> : vector<16x4xf32>
    %18 = tpu.matmul %16, %17, %cst_14 {dimension_numbers = #tpu.dot_dimension_numbers<[1], [0], [0], [1], [0, 0, 1, 1], [], []>} : vector<16x128xbf16>, vector<128x4xbf16>, vector<16x4xf32> -> vector<16x4xf32>
    %c0_15 = arith.constant 0 : index
    %c0_16 = arith.constant 0 : index
    %19 = vector.load %arg7[%c0_15, %c0_16] : memref<1x4xf32, #tpu.memory_space<vmem>>, vector<1x4xf32>
    %20 = vector.broadcast %19 : vector<1x4xf32> to vector<16x4xf32>
    %21 = arith.addf %18, %20 : vector<16x4xf32>
    %c0_17 = arith.constant 0 : index
    %c0_18 = arith.constant 0 : index
    %22 = vector.load %arg8[%c0_17, %c0_18] : memref<16x4xf32, #tpu.memory_space<vmem>>, vector<16x4xf32>
    tpu.vector_store %arg8[%c0_17, %c0_18], %21 {strides = array<i32>} : memref<16x4xf32, #tpu.memory_space<vmem>>, vector<16x4xf32>,
    return
  }
  func.func @transform_0(%arg0: i32) -> (i32, i32) {
    %c0_i32 = arith.constant 0 : i32
    %c0_i32_0 = arith.constant 0 : i32
    return %arg0, %c0_i32 : i32, i32
  }
  func.func @transform_1(%arg0: i32) -> (i32, i32) {
    %c0_i32 = arith.constant 0 : i32
    %c0_i32_0 = arith.constant 0 : i32
    %c0_i32_1 = arith.constant 0 : i32
    return %c0_i32, %c0_i32_0 : i32, i32
  }
  func.func @transform_2(%arg0: i32) -> (i32, i32) {
    %c0_i32 = arith.constant 0 : i32
    %c0_i32_0 = arith.constant 0 : i32
    %c0_i32_1 = arith.constant 0 : i32
    return %c0_i32, %c0_i32_0 : i32, i32
  }
  func.func @transform_3(%arg0: i32) -> (i32, i32) {
    %c0_i32 = arith.constant 0 : i32
    %c0_i32_0 = arith.constant 0 : i32
    %c0_i32_1 = arith.constant 0 : i32
    return %c0_i32, %c0_i32_0 : i32, i32
  }
  func.func @transform_4(%arg0: i32) -> (i32, i32) {
    %c0_i32 = arith.constant 0 : i32
    %c0_i32_0 = arith.constant 0 : i32
    %c0_i32_1 = arith.constant 0 : i32
    return %c0_i32, %c0_i32_0 : i32, i32
  }
  func.func @transform_5(%arg0: i32) -> (i32, i32) {
    %c0_i32 = arith.constant 0 : i32
    %c0_i32_0 = arith.constant 0 : i32
    %c0_i32_1 = arith.constant 0 : i32
    return %c0_i32, %c0_i32_0 : i32, i32
  }
  func.func @transform_6(%arg0: i32) -> (i32, i32) {
    %c0_i32 = arith.constant 0 : i32
    %c0_i32_0 = arith.constant 0 : i32
    %c0_i32_1 = arith.constant 0 : i32
    return %c0_i32, %c0_i32_0 : i32, i32
  }
  func.func @transform_7(%arg0: i32) -> (i32, i32) {
    %c0_i32 = arith.constant 0 : i32
    %c0_i32_0 = arith.constant 0 : i32
    return %arg0, %c0_i32 : i32, i32
  }
}

</mosaic_0001>

<llo_original>
// kernel: qnetwork_forward.1
$region0: #{qnetwork_forward.1}
  #allocation0 [shape = 'u32[]', space=smem, size = 0x4, offset = 0x4, fixed_abs, tag = 'smem constant byte address 0x4 - core index']
  #allocation1 [shape = 'u32[144,128]{1,0:T(1,128)}', space=vmem, size = 0x12000, scoped, tag = 'internal scratch']
  %s0 = inlined_call_operand.vmem [shape: bf16[16,16], index: 0, kind: input, shape index: {}]
  %s1 = inlined_call_operand.vmem [shape: bf16[16,128], index: 1, kind: input, shape index: {}]
  %s2 = inlined_call_operand.vmem [shape: f32[1,128], index: 2, kind: input, shape index: {}]
  %s3 = inlined_call_operand.vmem [shape: bf16[128,128], index: 3, kind: input, shape index: {}]
  %s4 = inlined_call_operand.vmem [shape: f32[1,128], index: 4, kind: input, shape index: {}]
  %s5 = inlined_call_operand.vmem [shape: bf16[128,4], index: 5, kind: input, shape index: {}]
  %s6 = inlined_call_operand.vmem [shape: f32[1,4], index: 6, kind: input, shape index: {}]
  %s7 = inlined_call_operand.vmem [shape: f32[16,4], index: 7, kind: output, shape index: {}]
  %s8 = sld [smem:[#allocation0]]
  $region38: #{qnetwork_forward.1} parent=0
    _
  %s10 = ssub.s32 1, %s8
  %s11 = scalar_select 0, %s10, %s8
  // Predicated region
  $region2: #{qnetwork_forward.1} parent=0 // pred_check
    _
  $region3: #{qnetwork_forward.1} parent=0 // pred_check_branch
    %13 = sbr.rel (0) target = $region5
  $region4: #{qnetwork_forward.1} parent=0 // pred_region
    _
  $region5: #{qnetwork_forward.1} parent=0 // pred_fallthru
    _
  // Predicated region
  $region6: #{qnetwork_forward.1} parent=0 // pred_check
    _
  $region7: #{qnetwork_forward.1} parent=0 // pred_check_branch
    %15 = sbr.rel (0) target = $region9
  $region8: #{qnetwork_forward.1} parent=0 // pred_region
    _
  $region9: #{qnetwork_forward.1} parent=0 // pred_fallthru
    _
  // Predicated region
  $region10: #{qnetwork_forward.1} parent=0 // pred_check
    _
  $region11: #{qnetwork_forward.1} parent=0 // pred_check_branch
    %17 = sbr.rel (0) target = $region13
  $region12: #{qnetwork_forward.1} parent=0 // pred_region
    _
  $region13: #{qnetwork_forward.1} parent=0 // pred_fallthru
    _
  // Predicated region
  $region14: #{qnetwork_forward.1} parent=0 // pred_check
    _
  $region15: #{qnetwork_forward.1} parent=0 // pred_check_branch
    %19 = sbr.rel (0) target = $region17
  $region16: #{qnetwork_forward.1} parent=0 // pred_region
    _
  $region17: #{qnetwork_forward.1} parent=0 // pred_fallthru
    _
  // Predicated region
  $region18: #{qnetwork_forward.1} parent=0 // pred_check
    _
  $region19: #{qnetwork_forward.1} parent=0 // pred_check_branch
    %21 = sbr.rel (0) target = $region21
  $region20: #{qnetwork_forward.1} parent=0 // pred_region
    _
  $region21: #{qnetwork_forward.1} parent=0 // pred_fallthru
    _
  // Predicated region
  $region22: #{qnetwork_forward.1} parent=0 // pred_check
    _
  $region23: #{qnetwork_forward.1} parent=0 // pred_check_branch
    %23 = sbr.rel (0) target = $region25
  $region24: #{qnetwork_forward.1} parent=0 // pred_region
    _
  $region25: #{qnetwork_forward.1} parent=0 // pred_fallthru
    _
  // Predicated region
  $region26: #{qnetwork_forward.1} parent=0 // pred_check
    _
  $region27: #{qnetwork_forward.1} parent=0 // pred_check_branch
    %25 = sbr.rel (0) target = $region29
  $region28: #{qnetwork_forward.1} parent=0 // pred_region
    _
  $region29: #{qnetwork_forward.1} parent=0 // pred_fallthru
    _
  %v27 = vld [vmem:[%s0] sm:$0xf]
  %v28 = vld [vmem:[%s0 + $0x4] sm:$0xf]
  %v29 = vld [vmem:[%s1] sm:$0xf]
  %v30 = vld [vmem:[%s1 + $0x4] sm:$0xf]
  %v31 = vld [vmem:[%s2] sm:$0x1]
  %v33 = vlaneseq
  %v34 = vshrl.u32 %v33, 7
  %v35 = vsub.s32 0, %v34
  %v36 = vrot.slane %v31, %v35
  %v40 = vunpack.c.l.b16 %v27
  %v41 = vunpack.c.l.b16 %v28
  %v42 = vpack.c.b16 %v41, %v40
  %v45 = vunpack.c.l.b16 %v29
  %v46 = vunpack.c.l.b16 %v30
  %v47 = vpack.c.b16 %v46, %v45
  %vm49 = vcmask 130048
  %v51 = vsel %vm49, %v42, 0
  %53 = vmatprep.subr.bf16.mxu0 0
  %54 = vmatpush1.bf16.msra.mxu0 %v47
  %55 = vmatprep.subr.bf16.mxu0 0
  %56 = vmatpush1.bf16.msra.mxu0 0
  %57 = vmatprep.subr.bf16.mxu0 0
  %58 = vmatpush1.bf16.msra.mxu0 0
  %59 = vmatprep.subr.bf16.mxu0 0
  %60 = vmatpush1.bf16.msra.mxu0 0
  %61 = vmatprep.subr.bf16.mxu0 0
  %62 = vmatpush1.bf16.msra.mxu0 0
  %63 = vmatprep.subr.bf16.mxu0 0
  %64 = vmatpush1.bf16.msra.mxu0 0
  %65 = vmatprep.subr.bf16.mxu0 0
  %66 = vmatpush1.bf16.msra.mxu0 0
  %67 = vmatprep.subr.bf16.mxu0 0
  %68 = vmatpush1.bf16.msra.mxu0 0
  %69 = vmatprep.subr.bf16.mxu0 0
  %70 = vmatpush1.bf16.msra.mxu0 0
  %71 = vmatprep.subr.bf16.mxu0 0
  %72 = vmatpush1.bf16.msra.mxu0 0
  %73 = vmatprep.subr.bf16.mxu0 0
  %74 = vmatpush1.bf16.msra.mxu0 0
  %75 = vmatprep.subr.bf16.mxu0 0
  %76 = vmatpush1.bf16.msra.mxu0 0
  %77 = vmatprep.subr.bf16.mxu0 0
  %78 = vmatpush1.bf16.msra.mxu0 0
  %79 = vmatprep.subr.bf16.mxu0 0
  %80 = vmatpush1.bf16.msra.mxu0 0
  %81 = vmatprep.subr.bf16.mxu0 0
  %82 = vmatpush1.bf16.msra.mxu0 0
  %83 = vmatprep.subr.bf16.mxu0 0
  %84 = vmatpush1.bf16.msra.mxu0 0
  %85 = vmatprep.mubr.bf16.mxu0 0
  %86 = vmatmul.mubr.bf16.gmra.mrb[0].mxu0 %v51
  %v87 = vpop.f32.mrb[0].mxu0
  %v88 = vadd.f32 %v36, %v87
  %v89 = vpop.f32.mrb[0].mxu0
  %v90 = vpop.f32.mrb[0].mxu0
  %v91 = vadd.f32 %v36, %v90
  %v92 = vpop.f32.mrb[0].mxu0
  %93 = vdwg.mxu0
  %v94 = vmax.f32 %v88, 0.0
  %v95 = vmax.f32 %v91, 0.0
  %v96 = vpack.c.bf16 %v95, %v94
  %v97 = vld [vmem:[%s3] sm:$0xf]
  %v98 = vld [vmem:[%s3 + $0x4] sm:$0xf]
  %v99 = vld [vmem:[%s3 + $0x8] sm:$0xf]
  %v100 = vld [vmem:[%s3 + $0xc] sm:$0xf]
  %v101 = vld [vmem:[%s3 + $0x10] sm:$0xf]
  %v102 = vld [vmem:[%s3 + $0x14] sm:$0xf]
  %v103 = vld [vmem:[%s3 + $0x18] sm:$0xf]
  %v104 = vld [vmem:[%s3 + $0x1c] sm:$0xf]
  %v105 = vld [vmem:[%s3 + $0x20] sm:$0xf]
  %v106 = vld [vmem:[%s3 + $0x24] sm:$0xf]
  %v107 = vld [vmem:[%s3 + $0x28] sm:$0xf]
  %v108 = vld [vmem:[%s3 + $0x2c] sm:$0xf]
  %v109 = vld [vmem:[%s3 + $0x30] sm:$0xf]
  %v110 = vld [vmem:[%s3 + $0x34] sm:$0xf]
  %v111 = vld [vmem:[%s3 + $0x38] sm:$0xf]
  %v112 = vld [vmem:[%s3 + $0x3c] sm:$0xf]
  %v113 = vld [vmem:[%s4] sm:$0x1]
  %v115 = vlaneseq
  %v116 = vshrl.u32 %v115, 7
  %v117 = vsub.s32 0, %v116
  %v118 = vrot.slane %v113, %v117
  %v136 = vunpack.c.l.b16 %v97
  %v137 = vunpack.c.l.b16 %v98
  %v138 = vunpack.c.l.b16 %v99
  %v139 = vunpack.c.l.b16 %v100
  %v140 = vunpack.c.l.b16 %v101
  %v141 = vunpack.c.l.b16 %v102
  %v142 = vunpack.c.l.b16 %v103
  %v143 = vunpack.c.l.b16 %v104
  %v144 = vunpack.c.l.b16 %v105
  %v145 = vunpack.c.l.b16 %v106
  %v146 = vunpack.c.l.b16 %v107
  %v147 = vunpack.c.l.b16 %v108
  %v148 = vunpack.c.l.b16 %v109
  %v149 = vunpack.c.l.b16 %v110
  %v150 = vunpack.c.l.b16 %v111
  %v151 = vunpack.c.l.b16 %v112
  %v152 = vpack.c.b16 %v137, %v136
  %v153 = vpack.c.b16 %v139, %v138
  %v154 = vpack.c.b16 %v141, %v140
  %v155 = vpack.c.b16 %v143, %v142
  %v156 = vpack.c.b16 %v145, %v144
  %v157 = vpack.c.b16 %v147, %v146
  %v158 = vpack.c.b16 %v149, %v148
  %v159 = vpack.c.b16 %v151, %v150
  %168 = vmatprep.subr.bf16.mxu0 0
  %169 = vmatpush1.bf16.msra.mxu0 %v152
  %170 = vmatprep.subr.bf16.mxu0 0
  %171 = vmatpush1.bf16.msra.mxu0 %v153
  %172 = vmatprep.subr.bf16.mxu0 0
  %173 = vmatpush1.bf16.msra.mxu0 %v154
  %174 = vmatprep.subr.bf16.mxu0 0
  %175 = vmatpush1.bf16.msra.mxu0 %v155
  %176 = vmatprep.subr.bf16.mxu0 0
  %177 = vmatpush1.bf16.msra.mxu0 %v156
  %178 = vmatprep.subr.bf16.mxu0 0
  %179 = vmatpush1.bf16.msra.mxu0 %v157
  %180 = vmatprep.subr.bf16.mxu0 0
  %181 = vmatpush1.bf16.msra.mxu0 %v158
  %182 = vmatprep.subr.bf16.mxu0 0
  %183 = vmatpush1.bf16.msra.mxu0 %v159
  %184 = vmatprep.subr.bf16.mxu0 0
  %185 = vmatpush1.bf16.msra.mxu0 0
  %186 = vmatprep.subr.bf16.mxu0 0
  %187 = vmatpush1.bf16.msra.mxu0 0
  %188 = vmatprep.subr.bf16.mxu0 0
  %189 = vmatpush1.bf16.msra.mxu0 0
  %190 = vmatprep.subr.bf16.mxu0 0
  %191 = vmatpush1.bf16.msra.mxu0 0
  %192 = vmatprep.subr.bf16.mxu0 0
  %193 = vmatpush1.bf16.msra.mxu0 0
  %194 = vmatprep.subr.bf16.mxu0 0
  %195 = vmatpush1.bf16.msra.mxu0 0
  %196 = vmatprep.subr.bf16.mxu0 0
  %197 = vmatpush1.bf16.msra.mxu0 0
  %198 = vmatprep.subr.bf16.mxu0 0
  %199 = vmatpush1.bf16.msra.mxu0 0
  %200 = vmatprep.mubr.bf16.mxu0 0
  %201 = vmatmul.mubr.bf16.gmra.mrb[0].mxu0 %v96
  %v202 = vpop.f32.mrb[0].mxu0
  %v203 = vadd.f32 %v118, %v202
  %v204 = vpop.f32.mrb[0].mxu0
  %v205 = vpop.f32.mrb[0].mxu0
  %v206 = vadd.f32 %v118, %v205
  %v207 = vpop.f32.mrb[0].mxu0
  %208 = vdwg.mxu0
  %v209 = vmax.f32 %v203, 0.0
  %v210 = vmax.f32 %v206, 0.0
  %v211 = vpack.c.bf16 %v210, %v209
  %v212 = vld [vmem:[%s5] sm:$0xf]
  %v213 = vld [vmem:[%s5 + $0x4] sm:$0xf]
  %v214 = vld [vmem:[%s5 + $0x8] sm:$0xf]
  %v215 = vld [vmem:[%s5 + $0xc] sm:$0xf]
  %v216 = vld [vmem:[%s5 + $0x10] sm:$0xf]
  %v217 = vld [vmem:[%s5 + $0x14] sm:$0xf]
  %v218 = vld [vmem:[%s5 + $0x18] sm:$0xf]
  %v219 = vld [vmem:[%s5 + $0x1c] sm:$0xf]
  %v220 = vld [vmem:[%s5 + $0x20] sm:$0xf]
  %v221 = vld [vmem:[%s5 + $0x24] sm:$0xf]
  %v222 = vld [vmem:[%s5 + $0x28] sm:$0xf]
  %v223 = vld [vmem:[%s5 + $0x2c] sm:$0xf]
  %v224 = vld [vmem:[%s5 + $0x30] sm:$0xf]
  %v225 = vld [vmem:[%s5 + $0x34] sm:$0xf]
  %v226 = vld [vmem:[%s5 + $0x38] sm:$0xf]
  %v227 = vld [vmem:[%s5 + $0x3c] sm:$0xf]
  %v228 = vld [vmem:[%s6] sm:$0x1]
  %v230 = vlaneseq
  %v231 = vshrl.u32 %v230, 7
  %v232 = vsub.s32 0, %v231
  %v233 = vrot.slane %v228, %v232
  %v251 = vunpack.c.l.b16 %v212
  %v252 = vunpack.c.l.b16 %v213
  %v253 = vunpack.c.l.b16 %v214
  %v254 = vunpack.c.l.b16 %v215
  %v255 = vunpack.c.l.b16 %v216
  %v256 = vunpack.c.l.b16 %v217
  %v257 = vunpack.c.l.b16 %v218
  %v258 = vunpack.c.l.b16 %v219
  %v259 = vunpack.c.l.b16 %v220
  %v260 = vunpack.c.l.b16 %v221
  %v261 = vunpack.c.l.b16 %v222
  %v262 = vunpack.c.l.b16 %v223
  %v263 = vunpack.c.l.b16 %v224
  %v264 = vunpack.c.l.b16 %v225
  %v265 = vunpack.c.l.b16 %v226
  %v266 = vunpack.c.l.b16 %v227
  %v267 = vpack.c.b16 %v252, %v251
  %v268 = vpack.c.b16 %v254, %v253
  %v269 = vpack.c.b16 %v256, %v255
  %v270 = vpack.c.b16 %v258, %v257
  %v271 = vpack.c.b16 %v260, %v259
  %v272 = vpack.c.b16 %v262, %v261
  %v273 = vpack.c.b16 %v264, %v263
  %v274 = vpack.c.b16 %v266, %v265
  %283 = vmatprep.subr.bf16.mxu0 0
  %284 = vmatpush1.bf16.msra.mxu0 %v267
  %285 = vmatprep.subr.bf16.mxu0 0
  %286 = vmatpush1.bf16.msra.mxu0 %v268
  %287 = vmatprep.subr.bf16.mxu0 0
  %288 = vmatpush1.bf16.msra.mxu0 %v269
  %289 = vmatprep.subr.bf16.mxu0 0
  %290 = vmatpush1.bf16.msra.mxu0 %v270
  %291 = vmatprep.subr.bf16.mxu0 0
  %292 = vmatpush1.bf16.msra.mxu0 %v271
  %293 = vmatprep.subr.bf16.mxu0 0
  %294 = vmatpush1.bf16.msra.mxu0 %v272
  %295 = vmatprep.subr.bf16.mxu0 0
  %296 = vmatpush1.bf16.msra.mxu0 %v273
  %297 = vmatprep.subr.bf16.mxu0 0
  %298 = vmatpush1.bf16.msra.mxu0 %v274
  %299 = vmatprep.subr.bf16.mxu0 0
  %300 = vmatpush1.bf16.msra.mxu0 0
  %301 = vmatprep.subr.bf16.mxu0 0
  %302 = vmatpush1.bf16.msra.mxu0 0
  %303 = vmatprep.subr.bf16.mxu0 0
  %304 = vmatpush1.bf16.msra.mxu0 0
  %305 = vmatprep.subr.bf16.mxu0 0
  %306 = vmatpush1.bf16.msra.mxu0 0
  %307 = vmatprep.subr.bf16.mxu0 0
  %308 = vmatpush1.bf16.msra.mxu0 0
  %309 = vmatprep.subr.bf16.mxu0 0
  %310 = vmatpush1.bf16.msra.mxu0 0
  %311 = vmatprep.subr.bf16.mxu0 0
  %312 = vmatpush1.bf16.msra.mxu0 0
  %313 = vmatprep.subr.bf16.mxu0 0
  %314 = vmatpush1.bf16.msra.mxu0 0
  %315 = vmatprep.mubr.bf16.mxu0 0
  %316 = vmatmul.mubr.bf16.gmra.mrb[0].mxu0 %v211
  %v317 = vpop.f32.mrb[0].mxu0
  %v318 = vadd.f32 %v233, %v317
  %v319 = vpop.f32.mrb[0].mxu0
  %v320 = vpop.f32.mrb[0].mxu0
  %v321 = vadd.f32 %v233, %v320
  %v322 = vpop.f32.mrb[0].mxu0
  %323 = vdwg.mxu0
  %vm324 = vcmask 31744
  %325 = vst.msk [vmem:[%s7] sm:$0xff] %vm324, %v318
  %326 = vst.msk [vmem:[%s7 + $0x8] sm:$0xff] %vm324, %v321
  // Predicated region
  $region30: #{qnetwork_forward.1} parent=0 // pred_check
    _
  $region31: #{qnetwork_forward.1} parent=0 // pred_check_branch
    %328 = sbr.rel (0) target = $region33
  $region32: #{qnetwork_forward.1} parent=0 // pred_region
    _
  $region33: #{qnetwork_forward.1} parent=0 // pred_fallthru
    _
  // Predicated region
  $region34: #{qnetwork_forward.1} parent=0 // pred_check
    _
  $region35: #{qnetwork_forward.1} parent=0 // pred_check_branch
    %330 = sbr.rel (0) target = $region37
  $region36: #{qnetwork_forward.1} parent=0 // pred_region
    _
  $region37: #{qnetwork_forward.1} parent=0 // pred_fallthru
    _

</llo_original>
